<compile_context>
chip_gen: v7x
topology: tpu7x:2x2x1
jax: 0.10.0
libtpu: 0.0.40
codegen_flags: <defaults>
</compile_context>

<pallas_src>
import jax
import jax.numpy as jnp
from jax.experimental import pallas as pl
from jax.experimental.pallas import tpu as pltpu


INPUT_DIM = 100
LANES = 128          # lane-aligned feature / output width
LATENT_DIM = 8
H1 = 64
H2 = 32
EPS_LO, EPS_HI = 100, 108          # eps lanes inside the x slab
TB_MAX = 2048                      # max batch-tile rows (sweep 1024-2048)

# ---- weight-slab row offsets (bf16 slab, 128 lanes wide) ----
R_WE1 = 0       # (128, 64)   encoder-1, input padded 100 -> 128 (zero rows)
R_WD3 = 128     # (64, 128)   decoder-3, output padded 100 -> 128 (zero cols)
R_WE2 = 192     # (64, 32)    encoder-2
R_WDC = 256     # (64, 72)    blockdiag(decoder-2 (32,64), classifier-2 (32,1->8))
R_WH = 320      # (32, 16)    fused mu | logvar head
R_WZ = 352      # (8, 64)     fused decoder-1 | classifier-1
R_B = 368       # bias rows: be1, be2, bh, bz, bdc, bd3
SLAB_ROWS = 384


def _vae_kernel(x_ref, w_ref, out_ref):
    f32 = jnp.float32
    bf16 = jnp.bfloat16

    x = x_ref[...]                                   # (TB, 128) bf16
    eps = x[:, EPS_LO:EPS_HI].astype(f32)            # reparam noise (TB, 8)

    # ---- weight slab views (single VMEM-resident stream) ----
    we1 = w_ref[R_WE1:R_WE1 + 128, 0:H1]
    wd3 = w_ref[R_WD3:R_WD3 + 64, :]
    we2 = w_ref[R_WE2:R_WE2 + 64, 0:H2]
    wdc = w_ref[R_WDC:R_WDC + 64, 0:72]
    wh = w_ref[R_WH:R_WH + 32, 0:2 * LATENT_DIM]
    wz = w_ref[R_WZ:R_WZ + 8, 0:2 * H2]
    be1 = w_ref[R_B + 0:R_B + 1, 0:H1].astype(f32)
    be2 = w_ref[R_B + 1:R_B + 2, 0:H2].astype(f32)
    bh = w_ref[R_B + 2:R_B + 3, 0:2 * LATENT_DIM].astype(f32)
    bz = w_ref[R_B + 3:R_B + 4, 0:2 * H2].astype(f32)
    bdc = w_ref[R_B + 4:R_B + 5, 0:72].astype(f32)
    bd3 = w_ref[R_B + 5:R_B + 6, :].astype(f32)

    # ---- encoder: Linear(100->64)+ReLU, Linear(64->32)+ReLU ----
    h = jnp.dot(x, we1, preferred_element_type=f32) + be1
    h = jnp.maximum(h, 0.0).astype(bf16)
    h = jnp.dot(h, we2, preferred_element_type=f32) + be2
    h = jnp.maximum(h, 0.0).astype(bf16)

    # ---- fused mu | logvar head (one matmul, lane split) ----
    head = jnp.dot(h, wh, preferred_element_type=f32) + bh
    mu = head[:, 0:LATENT_DIM]
    logvar = head[:, LATENT_DIM:2 * LATENT_DIM]

    # ---- reparameterize: z = mu + eps * exp(0.5 * logvar) ----
    z = mu + eps * jnp.exp(0.5 * logvar)             # (TB, 8) f32

    # ---- fused z -> (decoder-1 | classifier-1) + ReLU ----
    zz = jnp.dot(z.astype(bf16), wz, preferred_element_type=f32) + bz
    zz = jnp.maximum(zz, 0.0).astype(bf16)           # (TB, 64) = [dec(32)|cls(32)]

    # ---- fused block-diagonal decoder-2 | classifier-2 ----
    dd = jnp.dot(zz, wdc, preferred_element_type=f32) + bdc   # (TB, 72)
    d2 = jnp.maximum(dd[:, 0:H1], 0.0).astype(bf16)           # decoder path, ReLU
    cls = dd[:, H1:H1 + 1]                                    # logit, no ReLU

    # ---- decoder-3: Linear(64 -> 100, padded to 128 lanes) ----
    recon = jnp.dot(d2, wd3, preferred_element_type=f32) + bd3  # (TB, 128)

    # ---- single lane-dense output slab; small outputs land in the zero tail ----
    out_ref[...] = recon                              # lanes 100:128 are zero
    out_ref[:, 100:108] = mu
    out_ref[:, 108:116] = logvar
    out_ref[:, 116:124] = z
    out_ref[:, 124:125] = cls


@jax.jit
def vae_forward(x, eps, wslab):
    """VAE forward in one batch-tiled Pallas kernel.

    Args:
      x:     (B, 100) f32 input.
      eps:   (B, 8)   f32 standard-normal noise (replaces torch.randn_like).
      wslab: (384, 128) bf16 pre-packed weight slab from pack_params().

    Returns (recon, mu, logvar, z, classifier_logits), matching forward().
    """
    B = x.shape[0]

    # ---- batch tiling: big tiles, but >= 2 grid steps when possible (v7x) ----
    b8 = ((B + 7) // 8) * 8
    if b8 >= 16:
        tb = min(TB_MAX, ((b8 + 15) // 16) * 8)   # ~ceil(b8/2) rounded to 8
    else:
        tb = b8
    bp = ((b8 + tb - 1) // tb) * tb
    grid = (bp // tb,)

    # ---- pack x | eps into one bf16 slab (lanes 0:100 = x, 100:108 = eps) ----
    xe = jnp.concatenate([x, eps], axis=1)                       # (B, 108)
    x_slab = jnp.pad(xe, ((0, bp - B), (0, LANES - 108))).astype(jnp.bfloat16)

    in_specs = [
        pl.BlockSpec((tb, LANES), lambda i: (i, 0)),             # activations
        pl.BlockSpec((SLAB_ROWS, LANES), lambda i: (0, 0)),      # resident weights
    ]
    out_specs = pl.BlockSpec((tb, LANES), lambda i: (i, 0))
    out_shape = jax.ShapeDtypeStruct((bp, LANES), jnp.float32)

    flops_per_row = 2 * (128 * H1 + H1 * H2 + H2 * 2 * LATENT_DIM
                         + LATENT_DIM * 2 * H2 + 2 * H2 * 72 + H1 * LANES)
    cost = pl.CostEstimate(
        flops=bp * flops_per_row,
        transcendentals=bp * LATENT_DIM,
        bytes_accessed=bp * LANES * (2 + 4) + SLAB_ROWS * LANES * 2,
    )

    out = pl.pallas_call(
        _vae_kernel,
        out_shape=out_shape,
        grid_spec=pltpu.PrefetchScalarGridSpec(
            num_scalar_prefetch=0,
            grid=grid,
            in_specs=in_specs,
            out_specs=out_specs,
        ),
        compiler_params=pltpu.CompilerParams(
            dimension_semantics=("parallel",),
            vmem_limit_bytes=32 * 1024 * 1024,
        ),
        cost_estimate=cost,
    )(x_slab, wslab)

    # ---- unpack the lane-dense slab back to the module's five outputs ----
    recon = out[:B, 0:INPUT_DIM]
    mu = out[:B, 100:108]
    logvar = out[:B, 108:116]
    z = out[:B, 116:124]
    cls = out[:B, 124:125]
    return recon, mu, logvar, z, cls


def pack_params(p):
    """Pack/pad all weights+biases into one (384, 128) bf16 slab. Call once."""
    slab = jnp.zeros((SLAB_ROWS, LANES), jnp.float32)
    # encoder-1, input features padded 100 -> 128 with zero rows
    slab = slab.at[R_WE1:R_WE1 + 128, 0:H1].set(
        jnp.pad(p["we1"], ((0, 128 - INPUT_DIM), (0, 0))))
    # decoder-3, output features padded 100 -> 128 with zero cols
    slab = slab.at[R_WD3:R_WD3 + 64, :].set(
        jnp.pad(p["wd3"], ((0, 0), (0, LANES - INPUT_DIM))))
    slab = slab.at[R_WE2:R_WE2 + 64, 0:H2].set(p["we2"])
    # block-diagonal decoder-2 | classifier-2 (classifier logit in column 64)
    wdc = jnp.zeros((2 * H2, 72), jnp.float32)
    wdc = wdc.at[0:H2, 0:H1].set(p["wd2"])
    wdc = wdc.at[H2:2 * H2, H1:H1 + 1].set(p["wc2"])
    slab = slab.at[R_WDC:R_WDC + 64, 0:72].set(wdc)
    # fused mu | logvar head
    slab = slab.at[R_WH:R_WH + 32, 0:2 * LATENT_DIM].set(
        jnp.concatenate([p["wmu"], p["wlv"]], axis=1))
    # fused decoder-1 | classifier-1
    slab = slab.at[R_WZ:R_WZ + 8, 0:2 * H2].set(
        jnp.concatenate([p["wd1"], p["wc1"]], axis=1))
    # bias rows
    slab = slab.at[R_B + 0, 0:H1].set(p["be1"][0])
    slab = slab.at[R_B + 1, 0:H2].set(p["be2"][0])
    slab = slab.at[R_B + 2, 0:2 * LATENT_DIM].set(
        jnp.concatenate([p["bmu"], p["blv"]], axis=1)[0])
    slab = slab.at[R_B + 3, 0:2 * H2].set(
        jnp.concatenate([p["bd1"], p["bc1"]], axis=1)[0])
    bdc = jnp.zeros((72,), jnp.float32).at[0:H1].set(p["bd2"][0])
    bdc = bdc.at[H1].set(p["bc2"][0, 0])
    slab = slab.at[R_B + 4, 0:72].set(bdc)
    slab = slab.at[R_B + 5, :].set(
        jnp.pad(p["bd3"], ((0, 0), (0, LANES - INPUT_DIM)))[0])
    return slab.astype(jnp.bfloat16)


def _init_linear(key, fan_in, fan_out):
    """PyTorch nn.Linear default init: U(-1/sqrt(fan_in), 1/sqrt(fan_in))."""
    kw, kb = jax.random.split(key)
    bound = 1.0 / jnp.sqrt(float(fan_in))
    w = jax.random.uniform(kw, (fan_in, fan_out), jnp.float32, -bound, bound)
    b = jax.random.uniform(kb, (1, fan_out), jnp.float32, -bound, bound)
    return w, b


def init_params(key):
    keys = jax.random.split(key, 10)
    p = {}
    p["we1"], p["be1"] = _init_linear(keys[0], INPUT_DIM, H1)
    p["we2"], p["be2"] = _init_linear(keys[1], H1, H2)
    p["wmu"], p["bmu"] = _init_linear(keys[2], H2, LATENT_DIM)
    p["wlv"], p["blv"] = _init_linear(keys[3], H2, LATENT_DIM)
    p["wd1"], p["bd1"] = _init_linear(keys[4], LATENT_DIM, H2)
    p["wd2"], p["bd2"] = _init_linear(keys[5], H2, H1)
    p["wd3"], p["bd3"] = _init_linear(keys[6], H1, INPUT_DIM)
    p["wc1"], p["bc1"] = _init_linear(keys[7], LATENT_DIM, H2)
    p["wc2"], p["bc2"] = _init_linear(keys[8], H2, 1)
    return p


def _reference_forward(x, eps, p):
    """Pure-JAX f32 reference for a correctness sanity check."""
    relu = lambda v: jnp.maximum(v, 0.0)
    h = relu(x @ p["we1"] + p["be1"])
    h = relu(h @ p["we2"] + p["be2"])
    mu = h @ p["wmu"] + p["bmu"]
    logvar = h @ p["wlv"] + p["blv"]
    z = mu + eps * jnp.exp(0.5 * logvar)
    d = relu(z @ p["wd1"] + p["bd1"])
    d = relu(d @ p["wd2"] + p["bd2"])
    recon = d @ p["wd3"] + p["bd3"]
    c = relu(z @ p["wc1"] + p["bc1"])
    cls = c @ p["wc2"] + p["bc2"]
    return recon, mu, logvar, z, cls


if __name__ == "__main__":
    B = 8
    key = jax.random.PRNGKey(0)
    k_params, k_x, k_eps = jax.random.split(key, 3)

    params = init_params(k_params)
    x = jax.random.normal(k_x, (B, INPUT_DIM), jnp.float32)
    # eps ~ N(0,1) stands in for torch.randn_like(std) in reparameterize().
    eps = jax.random.normal(k_eps, (B, LATENT_DIM), jnp.float32)

    wslab = pack_params(params)        # packed once, outside the jitted forward

    outs = vae_forward(x, eps, wslab)
    outs = jax.block_until_ready(outs)

    ref = _reference_forward(x, eps, params)
    for o, r in zip(outs, ref):
        assert o.shape == r.shape and o.dtype == r.dtype
        # bf16 matmul inputs (f32 accumulation) -> relaxed tolerance vs f32 ref.
        assert jnp.allclose(o, r, atol=5e-2, rtol=5e-2), "mismatch vs reference"

    print("KERNEL_OK")
</pallas_src>

<mosaic_0001>
module attributes {stable_mosaic.version = 11 : i64} {
  func.func @_vae_kernel(%arg0: i32, %arg1: memref<8x128xbf16, #tpu.memory_space<vmem>>, %arg2: memref<384x128xbf16, #tpu.memory_space<vmem>>, %arg3: memref<8x128xf32, #tpu.memory_space<vmem>>) attributes {dimension_semantics = [#tpu.dimension_semantics<parallel>], iteration_bounds = array<i64: 1>, scalar_prefetch = 0 : i64, scratch_operands = 0 : i64, tpu.core_type = #tpu.core_type<tc>, window_params = [{transform_indices = @transform_0, window_bounds = array<i64: 8, 128>}, {pipeline_mode = #tpu.pipeline_mode<synchronous>, transform_indices = @transform_1, window_bounds = array<i64: 384, 128>}, {transform_indices = @transform_2, window_bounds = array<i64: 8, 128>}]} {
    %c0 = arith.constant 0 : index
    %c0_0 = arith.constant 0 : index
    %0 = vector.load %arg1[%c0, %c0_0] : memref<8x128xbf16, #tpu.memory_space<vmem>>, vector<8x128xbf16>
    %1 = vector.extract_strided_slice %0 {offsets = [0, 100], sizes = [8, 8], strides = [1, 1]} : vector<8x128xbf16> to vector<8x8xbf16>
    %2 = arith.extf %1 : vector<8x8xbf16> to vector<8x8xf32>
    %c0_1 = arith.constant 0 : index
    %c0_2 = arith.constant 0 : index
    %3 = vector.load %arg2[%c0_1, %c0_2] : memref<384x128xbf16, #tpu.memory_space<vmem>>, vector<128x64xbf16>
    %c128 = arith.constant 128 : index
    %c0_3 = arith.constant 0 : index
    %4 = vector.load %arg2[%c128, %c0_3] : memref<384x128xbf16, #tpu.memory_space<vmem>>, vector<64x128xbf16>
    %c192 = arith.constant 192 : index
    %c0_4 = arith.constant 0 : index
    %5 = vector.load %arg2[%c192, %c0_4] : memref<384x128xbf16, #tpu.memory_space<vmem>>, vector<64x32xbf16>
    %c256 = arith.constant 256 : index
    %c0_5 = arith.constant 0 : index
    %6 = vector.load %arg2[%c256, %c0_5] : memref<384x128xbf16, #tpu.memory_space<vmem>>, vector<64x72xbf16>
    %c320 = arith.constant 320 : index
    %c0_6 = arith.constant 0 : index
    %7 = vector.load %arg2[%c320, %c0_6] : memref<384x128xbf16, #tpu.memory_space<vmem>>, vector<32x16xbf16>
    %c352 = arith.constant 352 : index
    %c0_7 = arith.constant 0 : index
    %8 = vector.load %arg2[%c352, %c0_7] : memref<384x128xbf16, #tpu.memory_space<vmem>>, vector<8x64xbf16>
    %c368 = arith.constant 368 : index
    %c0_8 = arith.constant 0 : index
    %9 = vector.load %arg2[%c368, %c0_8] : memref<384x128xbf16, #tpu.memory_space<vmem>>, vector<1x64xbf16>
    %10 = arith.extf %9 : vector<1x64xbf16> to vector<1x64xf32>
    %c369 = arith.constant 369 : index
    %c0_9 = arith.constant 0 : index
    %11 = vector.load %arg2[%c369, %c0_9] : memref<384x128xbf16, #tpu.memory_space<vmem>>, vector<1x32xbf16>
    %12 = arith.extf %11 : vector<1x32xbf16> to vector<1x32xf32>
    %c370 = arith.constant 370 : index
    %c0_10 = arith.constant 0 : index
    %13 = vector.load %arg2[%c370, %c0_10] : memref<384x128xbf16, #tpu.memory_space<vmem>>, vector<1x16xbf16>
    %14 = arith.extf %13 : vector<1x16xbf16> to vector<1x16xf32>
    %c371 = arith.constant 371 : index
    %c0_11 = arith.constant 0 : index
    %15 = vector.load %arg2[%c371, %c0_11] : memref<384x128xbf16, #tpu.memory_space<vmem>>, vector<1x64xbf16>
    %16 = arith.extf %15 : vector<1x64xbf16> to vector<1x64xf32>
    %c372 = arith.constant 372 : index
    %c0_12 = arith.constant 0 : index
    %17 = vector.load %arg2[%c372, %c0_12] : memref<384x128xbf16, #tpu.memory_space<vmem>>, vector<1x72xbf16>
    %18 = arith.extf %17 : vector<1x72xbf16> to vector<1x72xf32>
    %c373 = arith.constant 373 : index
    %c0_13 = arith.constant 0 : index
    %19 = vector.load %arg2[%c373, %c0_13] : memref<384x128xbf16, #tpu.memory_space<vmem>>, vector<1x128xbf16>
    %20 = arith.extf %19 : vector<1x128xbf16> to vector<1x128xf32>
    %cst = arith.constant dense<0.000000e+00> : vector<8x64xf32>
    %21 = tpu.matmul %0, %3, %cst {dimension_numbers = #tpu.dot_dimension_numbers<[1], [0], [0], [1], [0, 0, 1, 1], [], []>} : vector<8x128xbf16>, vector<128x64xbf16>, vector<8x64xf32> -> vector<8x64xf32>
    %22 = vector.broadcast %10 : vector<1x64xf32> to vector<8x64xf32>
    %23 = arith.addf %21, %22 : vector<8x64xf32>
    %cst_14 = arith.constant 0.000000e+00 : f32
    %24 = vector.broadcast %cst_14 : f32 to vector<8x64xf32>
    %25 = arith.maximumf %23, %24 : vector<8x64xf32>
    %26 = arith.truncf %25 : vector<8x64xf32> to vector<8x64xbf16>
    %cst_15 = arith.constant dense<0.000000e+00> : vector<8x32xf32>
    %27 = tpu.matmul %26, %5, %cst_15 {dimension_numbers = #tpu.dot_dimension_numbers<[1], [0], [0], [1], [0, 0, 1, 1], [], []>} : vector<8x64xbf16>, vector<64x32xbf16>, vector<8x32xf32> -> vector<8x32xf32>
    %28 = vector.broadcast %12 : vector<1x32xf32> to vector<8x32xf32>
    %29 = arith.addf %27, %28 : vector<8x32xf32>
    %cst_16 = arith.constant 0.000000e+00 : f32
    %30 = vector.broadcast %cst_16 : f32 to vector<8x32xf32>
    %31 = arith.maximumf %29, %30 : vector<8x32xf32>
    %32 = arith.truncf %31 : vector<8x32xf32> to vector<8x32xbf16>
    %cst_17 = arith.constant dense<0.000000e+00> : vector<8x16xf32>
    %33 = tpu.matmul %32, %7, %cst_17 {dimension_numbers = #tpu.dot_dimension_numbers<[1], [0], [0], [1], [0, 0, 1, 1], [], []>} : vector<8x32xbf16>, vector<32x16xbf16>, vector<8x16xf32> -> vector<8x16xf32>
    %34 = vector.broadcast %14 : vector<1x16xf32> to vector<8x16xf32>
    %35 = arith.addf %33, %34 : vector<8x16xf32>
    %36 = vector.extract_strided_slice %35 {offsets = [0, 0], sizes = [8, 8], strides = [1, 1]} : vector<8x16xf32> to vector<8x8xf32>
    %37 = vector.extract_strided_slice %35 {offsets = [0, 8], sizes = [8, 8], strides = [1, 1]} : vector<8x16xf32> to vector<8x8xf32>
    %cst_18 = arith.constant 5.000000e-01 : f32
    %38 = vector.broadcast %cst_18 : f32 to vector<8x8xf32>
    %39 = arith.mulf %38, %37 : vector<8x8xf32>
    %40 = math.exp %39 : vector<8x8xf32>
    %41 = arith.mulf %2, %40 : vector<8x8xf32>
    %42 = arith.addf %36, %41 : vector<8x8xf32>
    %43 = arith.truncf %42 : vector<8x8xf32> to vector<8x8xbf16>
    %cst_19 = arith.constant dense<0.000000e+00> : vector<8x64xf32>
    %44 = tpu.matmul %43, %8, %cst_19 {dimension_numbers = #tpu.dot_dimension_numbers<[1], [0], [0], [1], [0, 0, 1, 1], [], []>} : vector<8x8xbf16>, vector<8x64xbf16>, vector<8x64xf32> -> vector<8x64xf32>
    %45 = vector.broadcast %16 : vector<1x64xf32> to vector<8x64xf32>
    %46 = arith.addf %44, %45 : vector<8x64xf32>
    %cst_20 = arith.constant 0.000000e+00 : f32
    %47 = vector.broadcast %cst_20 : f32 to vector<8x64xf32>
    %48 = arith.maximumf %46, %47 : vector<8x64xf32>
    %49 = arith.truncf %48 : vector<8x64xf32> to vector<8x64xbf16>
    %cst_21 = arith.constant dense<0.000000e+00> : vector<8x72xf32>
    %50 = tpu.matmul %49, %6, %cst_21 {dimension_numbers = #tpu.dot_dimension_numbers<[1], [0], [0], [1], [0, 0, 1, 1], [], []>} : vector<8x64xbf16>, vector<64x72xbf16>, vector<8x72xf32> -> vector<8x72xf32>
    %51 = vector.broadcast %18 : vector<1x72xf32> to vector<8x72xf32>
    %52 = arith.addf %50, %51 : vector<8x72xf32>
    %53 = vector.extract_strided_slice %52 {offsets = [0, 0], sizes = [8, 64], strides = [1, 1]} : vector<8x72xf32> to vector<8x64xf32>
    %cst_22 = arith.constant 0.000000e+00 : f32
    %54 = vector.broadcast %cst_22 : f32 to vector<8x64xf32>
    %55 = arith.maximumf %53, %54 : vector<8x64xf32>
    %56 = arith.truncf %55 : vector<8x64xf32> to vector<8x64xbf16>
    %57 = vector.extract_strided_slice %52 {offsets = [0, 64], sizes = [8, 1], strides = [1, 1]} : vector<8x72xf32> to vector<8x1xf32>
    %cst_23 = arith.constant dense<0.000000e+00> : vector<8x128xf32>
    %58 = tpu.matmul %56, %4, %cst_23 {dimension_numbers = #tpu.dot_dimension_numbers<[1], [0], [0], [1], [0, 0, 1, 1], [], []>} : vector<8x64xbf16>, vector<64x128xbf16>, vector<8x128xf32> -> vector<8x128xf32>
    %59 = vector.broadcast %20 : vector<1x128xf32> to vector<8x128xf32>
    %60 = arith.addf %58, %59 : vector<8x128xf32>
    %c0_24 = arith.constant 0 : index
    %c0_25 = arith.constant 0 : index
    %61 = vector.load %arg3[%c0_24, %c0_25] : memref<8x128xf32, #tpu.memory_space<vmem>>, vector<8x128xf32>
    tpu.vector_store %arg3[%c0_24, %c0_25], %60 {strides = array<i32>} : memref<8x128xf32, #tpu.memory_space<vmem>>, vector<8x128xf32>,
    %c0_26 = arith.constant 0 : index
    %c100 = arith.constant 100 : index
    %62 = vector.load %arg3[%c0_26, %c100] : memref<8x128xf32, #tpu.memory_space<vmem>>, vector<8x8xf32>
    tpu.vector_store %arg3[%c0_26, %c100], %36 {strides = array<i32>} : memref<8x128xf32, #tpu.memory_space<vmem>>, vector<8x8xf32>,
    %c0_27 = arith.constant 0 : index
    %c108 = arith.constant 108 : index
    %63 = vector.load %arg3[%c0_27, %c108] : memref<8x128xf32, #tpu.memory_space<vmem>>, vector<8x8xf32>
    tpu.vector_store %arg3[%c0_27, %c108], %37 {strides = array<i32>} : memref<8x128xf32, #tpu.memory_space<vmem>>, vector<8x8xf32>,
    %c0_28 = arith.constant 0 : index
    %c116 = arith.constant 116 : index
    %64 = vector.load %arg3[%c0_28, %c116] : memref<8x128xf32, #tpu.memory_space<vmem>>, vector<8x8xf32>
    tpu.vector_store %arg3[%c0_28, %c116], %42 {strides = array<i32>} : memref<8x128xf32, #tpu.memory_space<vmem>>, vector<8x8xf32>,
    %c0_29 = arith.constant 0 : index
    %c124 = arith.constant 124 : index
    %65 = vector.load %arg3[%c0_29, %c124] : memref<8x128xf32, #tpu.memory_space<vmem>>, vector<8x1xf32>
    tpu.vector_store %arg3[%c0_29, %c124], %57 {strides = array<i32>} : memref<8x128xf32, #tpu.memory_space<vmem>>, vector<8x1xf32>,
    return
  }
  func.func @transform_0(%arg0: i32) -> (i32, i32) {
    %c0_i32 = arith.constant 0 : i32
    %c0_i32_0 = arith.constant 0 : i32
    return %arg0, %c0_i32 : i32, i32
  }
  func.func @transform_1(%arg0: i32) -> (i32, i32) {
    %c0_i32 = arith.constant 0 : i32
    %c0_i32_0 = arith.constant 0 : i32
    %c0_i32_1 = arith.constant 0 : i32
    return %c0_i32, %c0_i32_0 : i32, i32
  }
  func.func @transform_2(%arg0: i32) -> (i32, i32) {
    %c0_i32 = arith.constant 0 : i32
    %c0_i32_0 = arith.constant 0 : i32
    return %arg0, %c0_i32 : i32, i32
  }
}

</mosaic_0001>

<llo_original>
// kernel: vae_forward.1
$region0: #{vae_forward.1}
  #allocation0 [shape = 'u32[]', space=smem, size = 0x4, offset = 0x4, fixed_abs, tag = 'smem constant byte address 0x4 - core index']
  #allocation1 [shape = 'u32[144,128]{1,0:T(1,128)}', space=vmem, size = 0x12000, scoped, tag = 'internal scratch']
  %s0 = inlined_call_operand.vmem [shape: bf16[8,128], index: 0, kind: input, shape index: {}]
  %s1 = inlined_call_operand.hbm [shape: bf16[384,128], index: 1, kind: input, shape index: {}]
  %s2 = inlined_call_operand.vmem [shape: f32[8,128], index: 2, kind: output, shape index: {}]
  %s3 = sld [smem:[#allocation0]]
  $region22: #{vae_forward.1} parent=0
    _
  %s5 = ssub.s32 1, %s3
  %s6 = scalar_select 0, %s5, %s3
  $region1: #{vae_forward.1} parent=0
    #allocation2 [shape = 'u8[98304]{0}', space=vmem, size = 0x18000, scoped, tag = 'input window, operand 1, single buffered']
    #allocation3 [shape = 's32[1]{0}', space=sflag, size = 0x4, scoped, tag = 'scoped memory for vae_forward.1']
    %7 = vsyncpa [#allocation3], 0
    // Predicated region
    $region2: #{vae_forward.1} parent=1 // pred_check
      _
    $region3: #{vae_forward.1} parent=1 // pred_check_branch
      %9 = sbr.rel (0) target = $region5
    $region4: #{vae_forward.1} parent=1 // pred_region
      _
    $region5: #{vae_forward.1} parent=1 // pred_fallthru
      _
    // Predicated region
    $region6: #{vae_forward.1} parent=1 // pred_check
      _
    $region7: #{vae_forward.1} parent=1 // pred_check_branch
      %11 = sbr.rel (0) target = $region9
    $region8: #{vae_forward.1} parent=1 // pred_region
      %s13 = ssub.s32 3072, 3072
      %14 = vsyncadd [#allocation3], %s13
      %s15 = sshll.u32 [#allocation2], 4
      %s16 = int_to_ptr.vmem [resolvable:$true] %s15
      %21 = dma.hbm_to_vmem [thread:$0]  %s1, 3072, %s16, [#allocation3], 64, 64, 4
    $region9: #{vae_forward.1} parent=1 // pred_fallthru
      _
    // Predicated region
    $region10: #{vae_forward.1} parent=1 // pred_check
      _
    $region11: #{vae_forward.1} parent=1 // pred_check_branch
      %23 = sbr.rel (0) target = $region13
    $region12: #{vae_forward.1} parent=1 // pred_region
      %24 = dma.done [#allocation3], 3072
    $region13: #{vae_forward.1} parent=1 // pred_fallthru
      _
    %v26 = vld [vmem:[%s0] sm:$0xf]
    %v27 = vunpack.c.l.bf16 %v26
    %v28 = vld [vmem:[#allocation2] sm:$0xf]
    %v29 = vld [vmem:[#allocation2 + $0x4] sm:$0xf]
    %v30 = vld [vmem:[#allocation2 + $0x8] sm:$0xf]
    %v31 = vld [vmem:[#allocation2 + $0xc] sm:$0xf]
    %v32 = vld [vmem:[#allocation2 + $0x10] sm:$0xf]
    %v33 = vld [vmem:[#allocation2 + $0x14] sm:$0xf]
    %v34 = vld [vmem:[#allocation2 + $0x18] sm:$0xf]
    %v35 = vld [vmem:[#allocation2 + $0x1c] sm:$0xf]
    %v36 = vld [vmem:[#allocation2 + $0x20] sm:$0xf]
    %v37 = vld [vmem:[#allocation2 + $0x24] sm:$0xf]
    %v38 = vld [vmem:[#allocation2 + $0x28] sm:$0xf]
    %v39 = vld [vmem:[#allocation2 + $0x2c] sm:$0xf]
    %v40 = vld [vmem:[#allocation2 + $0x30] sm:$0xf]
    %v41 = vld [vmem:[#allocation2 + $0x34] sm:$0xf]
    %v42 = vld [vmem:[#allocation2 + $0x38] sm:$0xf]
    %v43 = vld [vmem:[#allocation2 + $0x3c] sm:$0xf]
    %v44 = vld [vmem:[#allocation2 + $0x40] sm:$0xf]
    %v45 = vld [vmem:[#allocation2 + $0x44] sm:$0xf]
    %v46 = vld [vmem:[#allocation2 + $0x48] sm:$0xf]
    %v47 = vld [vmem:[#allocation2 + $0x4c] sm:$0xf]
    %v48 = vld [vmem:[#allocation2 + $0x50] sm:$0xf]
    %v49 = vld [vmem:[#allocation2 + $0x54] sm:$0xf]
    %v50 = vld [vmem:[#allocation2 + $0x58] sm:$0xf]
    %v51 = vld [vmem:[#allocation2 + $0x5c] sm:$0xf]
    %v52 = vld [vmem:[#allocation2 + $0x60] sm:$0xf]
    %v53 = vld [vmem:[#allocation2 + $0x64] sm:$0xf]
    %v54 = vld [vmem:[#allocation2 + $0x68] sm:$0xf]
    %v55 = vld [vmem:[#allocation2 + $0x6c] sm:$0xf]
    %v56 = vld [vmem:[#allocation2 + $0x70] sm:$0xf]
    %v57 = vld [vmem:[#allocation2 + $0x74] sm:$0xf]
    %v58 = vld [vmem:[#allocation2 + $0x78] sm:$0xf]
    %v59 = vld [vmem:[#allocation2 + $0x7c] sm:$0xf]
    %v60 = vld [vmem:[#allocation2 + $0x80] sm:$0xf]
    %v61 = vld [vmem:[#allocation2 + $0x84] sm:$0xf]
    %v62 = vld [vmem:[#allocation2 + $0x88] sm:$0xf]
    %v63 = vld [vmem:[#allocation2 + $0x8c] sm:$0xf]
    %v64 = vld [vmem:[#allocation2 + $0x90] sm:$0xf]
    %v65 = vld [vmem:[#allocation2 + $0x94] sm:$0xf]
    %v66 = vld [vmem:[#allocation2 + $0x98] sm:$0xf]
    %v67 = vld [vmem:[#allocation2 + $0x9c] sm:$0xf]
    %v68 = vld [vmem:[#allocation2 + $0xa0] sm:$0xf]
    %v69 = vld [vmem:[#allocation2 + $0xa4] sm:$0xf]
    %v70 = vld [vmem:[#allocation2 + $0xa8] sm:$0xf]
    %v71 = vld [vmem:[#allocation2 + $0xac] sm:$0xf]
    %v72 = vld [vmem:[#allocation2 + $0xb0] sm:$0xf]
    %v73 = vld [vmem:[#allocation2 + $0xb8] sm:$0x1]
    %v74 = vunpack.c.l.bf16 %v73
    %v75 = vld [vmem:[#allocation2 + $0xb8] sm:$0x2]
    %v76 = vunpack.c.l.bf16 %v75
    %v77 = vld [vmem:[#allocation2 + $0xb8] sm:$0x4]
    %v78 = vunpack.c.l.bf16 %v77
    %v79 = vlaneseq
    %v80 = vshrl.u32 %v79, 7
    %v81 = vsub.s32 0, %v80
    %v82 = vrot.slane %v74, %v81
    %v99 = vunpack.c.l.b16 %v28
    %v100 = vunpack.c.l.b16 %v29
    %v101 = vunpack.c.l.b16 %v30
    %v102 = vunpack.c.l.b16 %v31
    %v103 = vunpack.c.l.b16 %v32
    %v104 = vunpack.c.l.b16 %v33
    %v105 = vunpack.c.l.b16 %v34
    %v106 = vunpack.c.l.b16 %v35
    %v107 = vunpack.c.l.b16 %v36
    %v108 = vunpack.c.l.b16 %v37
    %v109 = vunpack.c.l.b16 %v38
    %v110 = vunpack.c.l.b16 %v39
    %v111 = vunpack.c.l.b16 %v40
    %v112 = vunpack.c.l.b16 %v41
    %v113 = vunpack.c.l.b16 %v42
    %v114 = vunpack.c.l.b16 %v43
    %v115 = vpack.c.b16 %v100, %v99
    %v116 = vpack.c.b16 %v102, %v101
    %v117 = vpack.c.b16 %v104, %v103
    %v118 = vpack.c.b16 %v106, %v105
    %v119 = vpack.c.b16 %v108, %v107
    %v120 = vpack.c.b16 %v110, %v109
    %v121 = vpack.c.b16 %v112, %v111
    %v122 = vpack.c.b16 %v114, %v113
    %131 = vmatprep.subr.bf16.mxu0 0
    %132 = vmatpush1.bf16.msra.mxu0 %v115
    %133 = vmatprep.subr.bf16.mxu0 0
    %134 = vmatpush1.bf16.msra.mxu0 %v116
    %135 = vmatprep.subr.bf16.mxu0 0
    %136 = vmatpush1.bf16.msra.mxu0 %v117
    %137 = vmatprep.subr.bf16.mxu0 0
    %138 = vmatpush1.bf16.msra.mxu0 %v118
    %139 = vmatprep.subr.bf16.mxu0 0
    %140 = vmatpush1.bf16.msra.mxu0 %v119
    %141 = vmatprep.subr.bf16.mxu0 0
    %142 = vmatpush1.bf16.msra.mxu0 %v120
    %143 = vmatprep.subr.bf16.mxu0 0
    %144 = vmatpush1.bf16.msra.mxu0 %v121
    %145 = vmatprep.subr.bf16.mxu0 0
    %146 = vmatpush1.bf16.msra.mxu0 %v122
    %147 = vmatprep.subr.bf16.mxu0 0
    %148 = vmatpush1.bf16.msra.mxu0 0
    %149 = vmatprep.subr.bf16.mxu0 0
    %150 = vmatpush1.bf16.msra.mxu0 0
    %151 = vmatprep.subr.bf16.mxu0 0
    %152 = vmatpush1.bf16.msra.mxu0 0
    %153 = vmatprep.subr.bf16.mxu0 0
    %154 = vmatpush1.bf16.msra.mxu0 0
    %155 = vmatprep.subr.bf16.mxu0 0
    %156 = vmatpush1.bf16.msra.mxu0 0
    %157 = vmatprep.subr.bf16.mxu0 0
    %158 = vmatpush1.bf16.msra.mxu0 0
    %159 = vmatprep.subr.bf16.mxu0 0
    %160 = vmatpush1.bf16.msra.mxu0 0
    %161 = vmatprep.subr.bf16.mxu0 0
    %162 = vmatpush1.bf16.msra.mxu0 0
    %163 = vmatprep.mubr.bf16.mxu0 0
    %164 = vmatmul.mubr.bf16.gmra.mrb[0].mxu0 %v26
    %v165 = vpop.f32.mrb[0].mxu0
    %v166 = vadd.f32 %v82, %v165
    %v167 = vpop.f32.mrb[0].mxu0
    %v168 = vpop.f32.mrb[0].mxu0
    %v169 = vpop.f32.mrb[0].mxu0
    %170 = vdwg.mxu0
    %v171 = vmax.f32 %v166, 0.0
    %v172 = vpack.c.bf16 %v171, %v171
    %v173 = vlaneseq
    %v174 = vshrl.u32 %v173, 7
    %v175 = vsub.s32 1, %v174
    %v176 = vrot.slane %v74, %v175
    %v185 = vunpack.c.l.b16 %v52
    %v186 = vunpack.c.l.b16 %v53
    %v187 = vunpack.c.l.b16 %v54
    %v188 = vunpack.c.l.b16 %v55
    %v189 = vunpack.c.l.b16 %v56
    %v190 = vunpack.c.l.b16 %v57
    %v191 = vunpack.c.l.b16 %v58
    %v192 = vunpack.c.l.b16 %v59
    %v193 = vpack.c.b16 %v186, %v185
    %v194 = vpack.c.b16 %v188, %v187
    %v195 = vpack.c.b16 %v190, %v189
    %v196 = vpack.c.b16 %v192, %v191
    %vm201 = vcmask 523264
    %v203 = vsel %vm201, %v172, 0
    %205 = vmatprep.subr.bf16.mxu0 0
    %206 = vmatpush1.bf16.msra.mxu0 %v193
    %207 = vmatprep.subr.bf16.mxu0 0
    %208 = vmatpush1.bf16.msra.mxu0 %v194
    %209 = vmatprep.subr.bf16.mxu0 0
    %210 = vmatpush1.bf16.msra.mxu0 %v195
    %211 = vmatprep.subr.bf16.mxu0 0
    %212 = vmatpush1.bf16.msra.mxu0 %v196
    %213 = vmatprep.subr.bf16.mxu0 0
    %214 = vmatpush1.bf16.msra.mxu0 0
    %215 = vmatprep.subr.bf16.mxu0 0
    %216 = vmatpush1.bf16.msra.mxu0 0
    %217 = vmatprep.subr.bf16.mxu0 0
    %218 = vmatpush1.bf16.msra.mxu0 0
    %219 = vmatprep.subr.bf16.mxu0 0
    %220 = vmatpush1.bf16.msra.mxu0 0
    %221 = vmatprep.subr.bf16.mxu0 0
    %222 = vmatpush1.bf16.msra.mxu0 0
    %223 = vmatprep.subr.bf16.mxu0 0
    %224 = vmatpush1.bf16.msra.mxu0 0
    %225 = vmatprep.subr.bf16.mxu0 0
    %226 = vmatpush1.bf16.msra.mxu0 0
    %227 = vmatprep.subr.bf16.mxu0 0
    %228 = vmatpush1.bf16.msra.mxu0 0
    %229 = vmatprep.subr.bf16.mxu0 0
    %230 = vmatpush1.bf16.msra.mxu0 0
    %231 = vmatprep.subr.bf16.mxu0 0
    %232 = vmatpush1.bf16.msra.mxu0 0
    %233 = vmatprep.subr.bf16.mxu0 0
    %234 = vmatpush1.bf16.msra.mxu0 0
    %235 = vmatprep.subr.bf16.mxu0 0
    %236 = vmatpush1.bf16.msra.mxu0 0
    %237 = vmatprep.mubr.bf16.mxu0 0
    %238 = vmatmul.mubr.bf16.gmra.mrb[0].mxu0 %v203
    %v239 = vpop.f32.mrb[0].mxu0
    %v240 = vadd.f32 %v176, %v239
    %v241 = vpop.f32.mrb[0].mxu0
    %v242 = vpop.f32.mrb[0].mxu0
    %v243 = vpop.f32.mrb[0].mxu0
    %244 = vdwg.mxu0
    %v245 = vmax.f32 %v240, 0.0
    %v246 = vpack.c.bf16 %v245, %v245
    %v247 = vlaneseq
    %v248 = vshrl.u32 %v247, 7
    %v249 = vsub.s32 2, %v248
    %v250 = vrot.slane %v76, %v249
    %v255 = vunpack.c.l.b16 %v68
    %v256 = vunpack.c.l.b16 %v69
    %v257 = vunpack.c.l.b16 %v70
    %v258 = vunpack.c.l.b16 %v71
    %v259 = vpack.c.b16 %v256, %v255
    %v260 = vpack.c.b16 %v258, %v257
    %vm263 = vcmask 261120
    %v265 = vsel %vm263, %v246, 0
    %267 = vmatprep.subr.bf16.mxu0 0
    %268 = vmatpush1.bf16.msra.mxu0 %v259
    %269 = vmatprep.subr.bf16.mxu0 0
    %270 = vmatpush1.bf16.msra.mxu0 %v260
    %271 = vmatprep.subr.bf16.mxu0 0
    %272 = vmatpush1.bf16.msra.mxu0 0
    %273 = vmatprep.subr.bf16.mxu0 0
    %274 = vmatpush1.bf16.msra.mxu0 0
    %275 = vmatprep.subr.bf16.mxu0 0
    %276 = vmatpush1.bf16.msra.mxu0 0
    %277 = vmatprep.subr.bf16.mxu0 0
    %278 = vmatpush1.bf16.msra.mxu0 0
    %279 = vmatprep.subr.bf16.mxu0 0
    %280 = vmatpush1.bf16.msra.mxu0 0
    %281 = vmatprep.subr.bf16.mxu0 0
    %282 = vmatpush1.bf16.msra.mxu0 0
    %283 = vmatprep.subr.bf16.mxu0 0
    %284 = vmatpush1.bf16.msra.mxu0 0
    %285 = vmatprep.subr.bf16.mxu0 0
    %286 = vmatpush1.bf16.msra.mxu0 0
    %287 = vmatprep.subr.bf16.mxu0 0
    %288 = vmatpush1.bf16.msra.mxu0 0
    %289 = vmatprep.subr.bf16.mxu0 0
    %290 = vmatpush1.bf16.msra.mxu0 0
    %291 = vmatprep.subr.bf16.mxu0 0
    %292 = vmatpush1.bf16.msra.mxu0 0
    %293 = vmatprep.subr.bf16.mxu0 0
    %294 = vmatpush1.bf16.msra.mxu0 0
    %295 = vmatprep.subr.bf16.mxu0 0
    %296 = vmatpush1.bf16.msra.mxu0 0
    %297 = vmatprep.subr.bf16.mxu0 0
    %298 = vmatpush1.bf16.msra.mxu0 0
    %299 = vmatprep.mubr.bf16.mxu0 0
    %300 = vmatmul.mubr.bf16.gmra.mrb[0].mxu0 %v265
    %v301 = vpop.f32.mrb[0].mxu0
    %v302 = vadd.f32 %v250, %v301
    %v303 = vpop.f32.mrb[0].mxu0
    %v304 = vpop.f32.mrb[0].mxu0
    %v305 = vpop.f32.mrb[0].mxu0
    %306 = vdwg.mxu0
    %v307 = vmul.f32 %v302, 0.5
    %v308 = vmul.f32 %v307, 1.442695
    %v309 = vpow.pop %v308
    %311 = vrot.lane.b32.xlu0 %v309, 92
    %v312 = vpop.permute.xlu0 %311
    %v314 = vmul.f32 %v27, %v312
    %316 = vrot.lane.b32.xlu0 %v314, 28
    %v317 = vpop.permute.xlu0 %316
    %v319 = vadd.f32 %v302, %v317
    %v320 = vpack.c.bf16 %v319, %v319
    %v321 = vlaneseq
    %v322 = vshrl.u32 %v321, 7
    %v323 = vsub.s32 3, %v322
    %v324 = vrot.slane %v76, %v323
    %vm325 = vcmask 64512
    %v327 = vsel %vm325, %v320, 0
    %vm329 = vcmask 1043456
    %v331 = vsel %vm329, %v72, 0
    %333 = vmatprep.subr.bf16.mxu0 0
    %334 = vmatpush1.bf16.msra.mxu0 %v331
    %335 = vmatprep.subr.bf16.mxu0 0
    %336 = vmatpush1.bf16.msra.mxu0 0
    %337 = vmatprep.subr.bf16.mxu0 0
    %338 = vmatpush1.bf16.msra.mxu0 0
    %339 = vmatprep.subr.bf16.mxu0 0
    %340 = vmatpush1.bf16.msra.mxu0 0
    %341 = vmatprep.subr.bf16.mxu0 0
    %342 = vmatpush1.bf16.msra.mxu0 0
    %343 = vmatprep.subr.bf16.mxu0 0
    %344 = vmatpush1.bf16.msra.mxu0 0
    %345 = vmatprep.subr.bf16.mxu0 0
    %346 = vmatpush1.bf16.msra.mxu0 0
    %347 = vmatprep.subr.bf16.mxu0 0
    %348 = vmatpush1.bf16.msra.mxu0 0
    %349 = vmatprep.subr.bf16.mxu0 0
    %350 = vmatpush1.bf16.msra.mxu0 0
    %351 = vmatprep.subr.bf16.mxu0 0
    %352 = vmatpush1.bf16.msra.mxu0 0
    %353 = vmatprep.subr.bf16.mxu0 0
    %354 = vmatpush1.bf16.msra.mxu0 0
    %355 = vmatprep.subr.bf16.mxu0 0
    %356 = vmatpush1.bf16.msra.mxu0 0
    %357 = vmatprep.subr.bf16.mxu0 0
    %358 = vmatpush1.bf16.msra.mxu0 0
    %359 = vmatprep.subr.bf16.mxu0 0
    %360 = vmatpush1.bf16.msra.mxu0 0
    %361 = vmatprep.subr.bf16.mxu0 0
    %362 = vmatpush1.bf16.msra.mxu0 0
    %363 = vmatprep.subr.bf16.mxu0 0
    %364 = vmatpush1.bf16.msra.mxu0 0
    %365 = vmatprep.mubr.bf16.mxu0 0
    %366 = vmatmul.mubr.bf16.gmra.mrb[0].mxu0 %v327
    %v367 = vpop.f32.mrb[0].mxu0
    %v368 = vadd.f32 %v324, %v367
    %v369 = vpop.f32.mrb[0].mxu0
    %v370 = vpop.f32.mrb[0].mxu0
    %v371 = vpop.f32.mrb[0].mxu0
    %372 = vdwg.mxu0
    %v373 = vmax.f32 %v368, 0.0
    %v374 = vpack.c.bf16 %v373, %v373
    %v375 = vlaneseq
    %v376 = vshrl.u32 %v375, 7
    %v377 = vsub.s32 4, %v376
    %v378 = vrot.slane %v78, %v377
    %v387 = vunpack.c.l.b16 %v60
    %v388 = vunpack.c.l.b16 %v61
    %v389 = vunpack.c.l.b16 %v62
    %v390 = vunpack.c.l.b16 %v63
    %v391 = vunpack.c.l.b16 %v64
    %v392 = vunpack.c.l.b16 %v65
    %v393 = vunpack.c.l.b16 %v66
    %v394 = vunpack.c.l.b16 %v67
    %v395 = vpack.c.b16 %v388, %v387
    %v396 = vpack.c.b16 %v390, %v389
    %v397 = vpack.c.b16 %v392, %v391
    %v398 = vpack.c.b16 %v394, %v393
    %v404 = vsel %vm201, %v374, 0
    %406 = vmatprep.subr.bf16.mxu0 0
    %407 = vmatpush1.bf16.msra.mxu0 %v395
    %408 = vmatprep.subr.bf16.mxu0 0
    %409 = vmatpush1.bf16.msra.mxu0 %v396
    %410 = vmatprep.subr.bf16.mxu0 0
    %411 = vmatpush1.bf16.msra.mxu0 %v397
    %412 = vmatprep.subr.bf16.mxu0 0
    %413 = vmatpush1.bf16.msra.mxu0 %v398
    %414 = vmatprep.subr.bf16.mxu0 0
    %415 = vmatpush1.bf16.msra.mxu0 0
    %416 = vmatprep.subr.bf16.mxu0 0
    %417 = vmatpush1.bf16.msra.mxu0 0
    %418 = vmatprep.subr.bf16.mxu0 0
    %419 = vmatpush1.bf16.msra.mxu0 0
    %420 = vmatprep.subr.bf16.mxu0 0
    %421 = vmatpush1.bf16.msra.mxu0 0
    %422 = vmatprep.subr.bf16.mxu0 0
    %423 = vmatpush1.bf16.msra.mxu0 0
    %424 = vmatprep.subr.bf16.mxu0 0
    %425 = vmatpush1.bf16.msra.mxu0 0
    %426 = vmatprep.subr.bf16.mxu0 0
    %427 = vmatpush1.bf16.msra.mxu0 0
    %428 = vmatprep.subr.bf16.mxu0 0
    %429 = vmatpush1.bf16.msra.mxu0 0
    %430 = vmatprep.subr.bf16.mxu0 0
    %431 = vmatpush1.bf16.msra.mxu0 0
    %432 = vmatprep.subr.bf16.mxu0 0
    %433 = vmatpush1.bf16.msra.mxu0 0
    %434 = vmatprep.subr.bf16.mxu0 0
    %435 = vmatpush1.bf16.msra.mxu0 0
    %436 = vmatprep.subr.bf16.mxu0 0
    %437 = vmatpush1.bf16.msra.mxu0 0
    %438 = vmatprep.mubr.bf16.mxu0 0
    %439 = vmatmul.mubr.bf16.gmra.mrb[0].mxu0 %v404
    %v440 = vpop.f32.mrb[0].mxu0
    %v441 = vadd.f32 %v378, %v440
    %v442 = vpop.f32.mrb[0].mxu0
    %v443 = vpop.f32.mrb[0].mxu0
    %v444 = vpop.f32.mrb[0].mxu0
    %445 = vdwg.mxu0
    %v446 = vmax.f32 %v441, 0.0
    %v447 = vpack.c.bf16 %v446, %v446
    %v448 = vlaneseq
    %v449 = vshrl.u32 %v448, 7
    %v450 = vsub.s32 5, %v449
    %v451 = vrot.slane %v78, %v450
    %v460 = vunpack.c.l.b16 %v44
    %v461 = vunpack.c.l.b16 %v45
    %v462 = vunpack.c.l.b16 %v46
    %v463 = vunpack.c.l.b16 %v47
    %v464 = vunpack.c.l.b16 %v48
    %v465 = vunpack.c.l.b16 %v49
    %v466 = vunpack.c.l.b16 %v50
    %v467 = vunpack.c.l.b16 %v51
    %v468 = vpack.c.b16 %v461, %v460
    %v469 = vpack.c.b16 %v463, %v462
    %v470 = vpack.c.b16 %v465, %v464
    %v471 = vpack.c.b16 %v467, %v466
    %v477 = vsel %vm201, %v447, 0
    %479 = vmatprep.subr.bf16.mxu0 0
    %480 = vmatpush1.bf16.msra.mxu0 %v468
    %481 = vmatprep.subr.bf16.mxu0 0
    %482 = vmatpush1.bf16.msra.mxu0 %v469
    %483 = vmatprep.subr.bf16.mxu0 0
    %484 = vmatpush1.bf16.msra.mxu0 %v470
    %485 = vmatprep.subr.bf16.mxu0 0
    %486 = vmatpush1.bf16.msra.mxu0 %v471
    %487 = vmatprep.subr.bf16.mxu0 0
    %488 = vmatpush1.bf16.msra.mxu0 0
    %489 = vmatprep.subr.bf16.mxu0 0
    %490 = vmatpush1.bf16.msra.mxu0 0
    %491 = vmatprep.subr.bf16.mxu0 0
    %492 = vmatpush1.bf16.msra.mxu0 0
    %493 = vmatprep.subr.bf16.mxu0 0
    %494 = vmatpush1.bf16.msra.mxu0 0
    %495 = vmatprep.subr.bf16.mxu0 0
    %496 = vmatpush1.bf16.msra.mxu0 0
    %497 = vmatprep.subr.bf16.mxu0 0
    %498 = vmatpush1.bf16.msra.mxu0 0
    %499 = vmatprep.subr.bf16.mxu0 0
    %500 = vmatpush1.bf16.msra.mxu0 0
    %501 = vmatprep.subr.bf16.mxu0 0
    %502 = vmatpush1.bf16.msra.mxu0 0
    %503 = vmatprep.subr.bf16.mxu0 0
    %504 = vmatpush1.bf16.msra.mxu0 0
    %505 = vmatprep.subr.bf16.mxu0 0
    %506 = vmatpush1.bf16.msra.mxu0 0
    %507 = vmatprep.subr.bf16.mxu0 0
    %508 = vmatpush1.bf16.msra.mxu0 0
    %509 = vmatprep.subr.bf16.mxu0 0
    %510 = vmatpush1.bf16.msra.mxu0 0
    %511 = vmatprep.mubr.bf16.mxu0 0
    %512 = vmatmul.mubr.bf16.gmra.mrb[0].mxu0 %v477
    %v513 = vpop.f32.mrb[0].mxu0
    %v514 = vadd.f32 %v451, %v513
    %v515 = vpop.f32.mrb[0].mxu0
    %v516 = vpop.f32.mrb[0].mxu0
    %v517 = vpop.f32.mrb[0].mxu0
    %518 = vdwg.mxu0
    %519 = vst [vmem:[%s2] sm:$0xff] %v514
    %521 = vrot.lane.b32.xlu0 %v302, 100
    %v522 = vpop.permute.xlu0 %521
    %vm524 = vcmask 884512
    %525 = vst.msk [vmem:[%s2] sm:$0xff] %vm524, %v522
    %vm526 = vcmask 950112
    %527 = vst.msk [vmem:[%s2] sm:$0xff] %vm526, %v522
    %529 = vrot.lane.b32.xlu0 %v319, 116
    %v530 = vpop.permute.xlu0 %529
    %vm532 = vcmask 1015712
    %533 = vst.msk [vmem:[%s2] sm:$0xff] %vm532, %v530
    %535 = vrot.lane.b32.xlu0 %v441, 60
    %v536 = vpop.permute.xlu0 %535
    %vm538 = vcmask 1023968
    %539 = vst.msk [vmem:[%s2] sm:$0xff] %vm538, %v536
    // Predicated region
    $region14: #{vae_forward.1} parent=1 // pred_check
      _
    $region15: #{vae_forward.1} parent=1 // pred_check_branch
      %541 = sbr.rel (0) target = $region17
    $region16: #{vae_forward.1} parent=1 // pred_region
      _
    $region17: #{vae_forward.1} parent=1 // pred_fallthru
      _
    // Predicated region
    $region18: #{vae_forward.1} parent=1 // pred_check
      _
    $region19: #{vae_forward.1} parent=1 // pred_check_branch
      %543 = sbr.rel (0) target = $region21
    $region20: #{vae_forward.1} parent=1 // pred_region
      _
    $region21: #{vae_forward.1} parent=1 // pred_fallthru
      _
    %544 = vsyncpa [#allocation3], 1

</llo_original>
